<compile_context>
chip_gen: v6e
topology: v6e:2x2x1
jax: 0.10.0
libtpu: 0.0.40
codegen_flags: <defaults>
</compile_context>

<pallas_src>
import functools

import jax
import jax.numpy as jnp
from jax.experimental import pallas as pl
from jax.experimental.pallas import tpu as pltpu

_SHIFT = float(jnp.log(2.0))          # matches torch.log(torch.tensor(2.0)).item()
_SOFTPLUS_THRESHOLD = 20.0            # matches F.softplus default threshold


# ---------------------------------------------------------------------------
# Shared activation helpers (traced inside kernels)
# ---------------------------------------------------------------------------

def _softplus(x):
    # Thresholded softplus identical to F.softplus(beta=1, threshold=20):
    #   x                 if x > 20
    #   log1p(exp(x))     otherwise
    return jnp.where(x > _SOFTPLUS_THRESHOLD, x, jnp.log1p(jnp.exp(x)))


def _shifted_softplus_act(x):
    return _softplus(x) - _SHIFT


def _silu_act(x):
    return x * jax.nn.sigmoid(x)


def _round_up(n: int, m: int) -> int:
    return (n + m - 1) // m * m


def _device_kind() -> str:
    try:
        return jax.devices()[0].device_kind.lower()
    except Exception:
        return ""


def _default_block_bytes() -> int:
    # v5e scoped-VMEM default is 16 MiB -> keep in+out double-buffered blocks well
    # under it.  v6e/v7x defaults are 32 MiB and their faster HBM makes fixed
    # per-step overhead proportionally larger, so use 4 MiB blocks there.
    return (2 << 20) if "v5" in _device_kind() else (4 << 20)


def _native_bf16_ok() -> bool:
    # v5-class chips have no bf16 VPU/EUP; keep the f32 upcast there.
    return "v5" not in _device_kind()


# ---------------------------------------------------------------------------
# Standalone ShiftedSoftplus: softplus(x) - log(2)
# ---------------------------------------------------------------------------

def _shifted_softplus_kernel(x_ref, o_ref, *, compute_dtype):
    x = x_ref[...].astype(compute_dtype)
    sp = _softplus(x)
    o_ref[...] = (sp - jnp.asarray(_SHIFT, dtype=compute_dtype)).astype(o_ref.dtype)


def _choose_lanes(total: int):
    for lanes in (2048, 1024, 512, 256, 128):
        if total % lanes == 0:
            return lanes
    return None


def _choose_row_block(rows: int, lanes: int, itemsize: int, target_bytes: int) -> int:
    max_rows = max(8, (target_bytes // (lanes * itemsize)) // 8 * 8)
    if rows <= max_rows:
        return rows            # single block covering the full row extent
    return max_rows            # multiple of 8; last grid block may be ragged


def shifted_softplus(x: jax.Array) -> jax.Array:
    """Pallas TPU implementation of PaiNN's ShiftedSoftplus forward."""
    orig_shape = x.shape
    orig_dtype = x.dtype
    total = x.size
    itemsize = jnp.dtype(orig_dtype).itemsize

    compute_dtype = (
        orig_dtype if (orig_dtype == jnp.bfloat16 and _native_bf16_ok())
        else jnp.float32
    )
    target_bytes = _default_block_bytes()

    lanes = _choose_lanes(total)
    if lanes is not None:
        # Fast path: free reshape of a contiguous array, no padding / slicing.
        rows = total // lanes
        x2d = x.reshape(rows, lanes)
        pad_path = False
    else:
        # Fallback: one jnp.pad of the flattened array up to a lane multiple.
        lanes = 128
        rows = pl.cdiv(total, lanes)
        flat = jnp.pad(x.reshape(-1), (0, rows * lanes - total))
        x2d = flat.reshape(rows, lanes)
        pad_path = True

    row_block = _choose_row_block(rows, lanes, itemsize, target_bytes)
    grid = (pl.cdiv(rows, row_block),)

    out2d = pl.pallas_call(
        functools.partial(_shifted_softplus_kernel, compute_dtype=compute_dtype),
        out_shape=jax.ShapeDtypeStruct((rows, lanes), orig_dtype),
        grid_spec=pltpu.PrefetchScalarGridSpec(
            num_scalar_prefetch=0,
            grid=grid,
            in_specs=[pl.BlockSpec((row_block, lanes), lambda i: (i, 0))],
            out_specs=pl.BlockSpec((row_block, lanes), lambda i: (i, 0)),
        ),
        compiler_params=pltpu.CompilerParams(
            dimension_semantics=("parallel",)   # v7x: both TCs split the grid
        ),
    )(x2d)

    if pad_path:
        return out2d.reshape(-1)[:total].reshape(orig_shape)
    return out2d.reshape(orig_shape)


# ---------------------------------------------------------------------------
# Fused 2-layer MLP:  y = [softplus]( act(x @ w1 + b1) @ w2 + b2 )
# Both weight matrices live in VMEM; grid only over rows.  Used for
# readout_mlp (SiLU) and update_u / readout_uncertainty (ShiftedSoftplus).
# ---------------------------------------------------------------------------

def _mlp2_kernel(x_ref, w1_ref, b1_ref, w2_ref, b2_ref, o_ref, *,
                 mid_act, final_softplus):
    x = x_ref[...]
    h = jnp.dot(x, w1_ref[...], preferred_element_type=jnp.float32)
    h = h + b1_ref[...].astype(jnp.float32)
    h = mid_act(h)
    y = jnp.dot(h.astype(w2_ref.dtype), w2_ref[...],
                preferred_element_type=jnp.float32)
    y = y + b2_ref[...].astype(jnp.float32)
    if final_softplus:
        y = _softplus(y)
    o_ref[...] = y.astype(o_ref.dtype)


def fused_mlp2(x, w1, b1, w2, b2, *, mid_act, final_softplus=False, tm=512):
    """Single-pass Linear -> act -> Linear (-> softplus).

    Weights are given as (in, out) matrices (i.e. already transposed w.r.t.
    torch's nn.Linear.weight).  Returns an array of shape (M, w2.shape[1]).
    """
    M, K = x.shape
    K1, H = w1.shape
    H2, N = w2.shape
    assert K == K1 and H == H2 and b1.shape == (H,) and b2.shape == (N,)
    out_dtype = x.dtype

    # Lane-dense second-layer output: pad N up to a multiple of 128 so the MXU
    # sees an aligned shape and the output store is an unmasked vst.
    Np = _round_up(N, 128)
    if Np != N:
        w2p = jnp.pad(w2, ((0, 0), (0, Np - N)))
        b2p = jnp.pad(b2, (0, Np - N))
    else:
        w2p, b2p = w2, b2

    # Row tiling: multiple of 8, padded rows (zeros) are computed and discarded.
    tm = min(tm, _round_up(M, 8))
    Mp = _round_up(M, tm)
    xp = x if Mp == M else jnp.pad(x, ((0, Mp - M), (0, 0)))

    out = pl.pallas_call(
        functools.partial(_mlp2_kernel, mid_act=mid_act,
                          final_softplus=final_softplus),
        out_shape=jax.ShapeDtypeStruct((Mp, Np), out_dtype),
        grid_spec=pltpu.PrefetchScalarGridSpec(
            num_scalar_prefetch=0,
            grid=(Mp // tm,),
            in_specs=[
                pl.BlockSpec((tm, K), lambda i: (i, 0)),
                pl.BlockSpec((K, H), lambda i: (0, 0)),   # resident, fetched once
                pl.BlockSpec((1, H), lambda i: (0, 0)),
                pl.BlockSpec((H, Np), lambda i: (0, 0)),
                pl.BlockSpec((1, Np), lambda i: (0, 0)),
            ],
            out_specs=pl.BlockSpec((tm, Np), lambda i: (i, 0)),
        ),
        compiler_params=pltpu.CompilerParams(
            dimension_semantics=("parallel",)
        ),
    )(xp, w1, b1.reshape(1, H), w2p, b2p.reshape(1, Np))

    if Mp != M or Np != N:
        out = out[:M, :N]
    return out


# ---------------------------------------------------------------------------
# Module-level wrappers matching the PyTorch forward semantics
# ---------------------------------------------------------------------------

def readout_mlp_forward(node_scalar, w1, b1, w2, b2):
    """readout_mlp: Linear(h,h) -> SiLU -> Linear(h,1)."""
    return fused_mlp2(node_scalar, w1, b1, w2, b2,
                      mid_act=_silu_act, final_softplus=False)


def update_u_forward(v, w1, b1, w4, b4):
    """update_u / readout_uncertainty forward.

    v: (..., hidden).  Weights given as (in, out).
    Returns (f_v, f_alpha, f_beta), each of shape v.shape[:-1].
    """
    lead = v.shape[:-1]
    hidden = v.shape[-1]
    x2d = v.reshape(-1, hidden)
    # lin1 -> ShiftedSoftplus -> lin4 -> softplus, all inside one kernel.
    out = fused_mlp2(x2d, w1, b1, w4, b4,
                     mid_act=_shifted_softplus_act, final_softplus=True)
    out = out.reshape(*lead, 3)
    f_alpha = out[..., 0] + (1.0 + 1e-5)
    f_beta = out[..., 1]
    f_v = out[..., 2] + 1e-5
    return f_v, f_alpha, f_beta


# ---------------------------------------------------------------------------
# Self-test
# ---------------------------------------------------------------------------

if __name__ == "__main__":
    key = jax.random.PRNGKey(0)
    ks = jax.random.split(key, 8)

    hidden = 32
    nodes = 8

    # 1) Standalone ShiftedSoftplus (fast path: size is a multiple of 128).
    x = jax.random.normal(ks[0], (nodes, hidden), dtype=jnp.float32) * 5.0
    out = shifted_softplus(x)
    jax.block_until_ready(out)
    ref = jax.nn.softplus(x) - jnp.log(2.0)
    assert jnp.allclose(out, ref, atol=1e-5, rtol=1e-5), "ShiftedSoftplus fast-path mismatch"

    # 2) Standalone ShiftedSoftplus (ragged fallback path).
    xr = jax.random.normal(ks[1], (5, 7), dtype=jnp.float32) * 5.0
    outr = shifted_softplus(xr)
    jax.block_until_ready(outr)
    refr = jax.nn.softplus(xr) - jnp.log(2.0)
    assert jnp.allclose(outr, refr, atol=1e-5, rtol=1e-5), "ShiftedSoftplus pad-path mismatch"

    # Shared lin1 parameters (as (in, out) matrices).
    w1 = jax.random.normal(ks[2], (hidden, hidden), dtype=jnp.float32) / jnp.sqrt(hidden)
    b1 = jax.random.normal(ks[3], (hidden,), dtype=jnp.float32) * 0.1
    HI = jax.lax.Precision.HIGHEST

    # 3) readout_mlp: Linear -> SiLU -> Linear(hidden, 1), fully fused.
    node_scalar = jax.random.normal(ks[4], (nodes, hidden), dtype=jnp.float32)
    w2 = jax.random.normal(ks[5], (hidden, 1), dtype=jnp.float32) / jnp.sqrt(hidden)
    b2 = jnp.zeros((1,), jnp.float32)
    outm = readout_mlp_forward(node_scalar, w1, b1, w2, b2)
    jax.block_until_ready(outm)
    h_ref = jax.nn.silu(jnp.matmul(node_scalar, w1, precision=HI) + b1)
    ref_m = jnp.matmul(h_ref, w2, precision=HI) + b2
    assert jnp.allclose(outm, ref_m, atol=2e-3, rtol=2e-3), "readout_mlp mismatch"

    # 4) update_u / readout_uncertainty on node_vector (nodes, 3, hidden).
    node_vector = jax.random.normal(ks[6], (nodes, 3, hidden), dtype=jnp.float32)
    w4 = jax.random.normal(ks[7], (hidden, 3), dtype=jnp.float32) / jnp.sqrt(hidden)
    b4 = jnp.zeros((3,), jnp.float32)
    f_v, f_alpha, f_beta = update_u_forward(node_vector, w1, b1, w4, b4)
    jax.block_until_ready((f_v, f_alpha, f_beta))
    y_ref = jax.nn.softplus(jnp.matmul(node_vector, w1, precision=HI) + b1) - jnp.log(2.0)
    tmp = jnp.matmul(y_ref, w4, precision=HI) + b4
    ref_alpha = jax.nn.softplus(tmp[..., 0]) + 1.0 + 1e-5
    ref_beta = jax.nn.softplus(tmp[..., 1])
    ref_v = jax.nn.softplus(tmp[..., 2]) + 1e-5
    assert jnp.allclose(f_alpha, ref_alpha, atol=2e-3, rtol=2e-3), "update_u f_alpha mismatch"
    assert jnp.allclose(f_beta, ref_beta, atol=2e-3, rtol=2e-3), "update_u f_beta mismatch"
    assert jnp.allclose(f_v, ref_v, atol=2e-3, rtol=2e-3), "update_u f_v mismatch"

    print("KERNEL_OK")
</pallas_src>

<mosaic_0001>
module attributes {stable_mosaic.version = 11 : i64} {
  func.func @_shifted_softplus_kernel(%arg0: i32, %arg1: memref<1x256xf32, #tpu.memory_space<vmem>>, %arg2: memref<1x256xf32, #tpu.memory_space<vmem>>) attributes {dimension_semantics = [#tpu.dimension_semantics<parallel>], iteration_bounds = array<i64: 1>, scalar_prefetch = 0 : i64, scratch_operands = 0 : i64, tpu.core_type = #tpu.core_type<tc>, window_params = [{transform_indices = @transform_0, window_bounds = array<i64: 1, 256>}, {transform_indices = @transform_1, window_bounds = array<i64: 1, 256>}]} {
    %c0 = arith.constant 0 : index
    %c0_0 = arith.constant 0 : index
    %0 = vector.load %arg1[%c0, %c0_0] : memref<1x256xf32, #tpu.memory_space<vmem>>, vector<1x256xf32>
    %cst = arith.constant 2.000000e+01 : f32
    %1 = vector.broadcast %cst : f32 to vector<1x256xf32>
    %2 = arith.cmpf ogt, %0, %1 : vector<1x256xf32>
    %3 = math.exp %0 : vector<1x256xf32>
    %4 = math.log1p %3 : vector<1x256xf32>
    %5 = arith.select %2, %0, %4 : vector<1x256xi1>, vector<1x256xf32>
    %cst_1 = arith.constant 0.693147182 : f32
    %6 = vector.broadcast %cst_1 : f32 to vector<1x256xf32>
    %7 = arith.subf %5, %6 : vector<1x256xf32>
    %c0_2 = arith.constant 0 : index
    %c0_3 = arith.constant 0 : index
    %8 = vector.load %arg2[%c0_2, %c0_3] : memref<1x256xf32, #tpu.memory_space<vmem>>, vector<1x256xf32>
    tpu.vector_store %arg2[%c0_2, %c0_3], %7 {strides = array<i32>} : memref<1x256xf32, #tpu.memory_space<vmem>>, vector<1x256xf32>,
    return
  }
  func.func @transform_0(%arg0: i32) -> (i32, i32) {
    %c0_i32 = arith.constant 0 : i32
    %c0_i32_0 = arith.constant 0 : i32
    return %arg0, %c0_i32 : i32, i32
  }
  func.func @transform_1(%arg0: i32) -> (i32, i32) {
    %c0_i32 = arith.constant 0 : i32
    %c0_i32_0 = arith.constant 0 : i32
    return %arg0, %c0_i32 : i32, i32
  }
}

</mosaic_0001>

<llo_original>
// kernel: tpu_custom_call.1
$region0: #{tpu_custom_call.1}
  #allocation0 [shape = 'u32[]', space=smem, size = 0x4, offset = 0x4, fixed_abs, tag = 'smem constant byte address 0x4 - core index']
  #allocation1 [shape = 'u32[144,128]{1,0:T(1,128)}', space=vmem, size = 0x12000, scoped, tag = 'internal scratch']
  %s0 = inlined_call_operand.hbm [shape: f32[1,256], index: 0, kind: input, shape index: {}]
  %s1 = inlined_call_operand.hbm [shape: f32[1,256], index: 1, kind: output, shape index: {}]
  %s2 = sld [smem:[#allocation0]]
  $region18: #{tpu_custom_call.1} parent=0
    _
  %s4 = ssub.s32 1, %s2
  %s5 = scalar_select 0, %s4, %s2
  $region1: #{tpu_custom_call.1} parent=0
    #allocation2 [shape = 'u8[1024]{0}', space=vmem, size = 0x400, scoped, tag = 'input window, operand 0, single buffered']
    #allocation3 [shape = 's32[1]{0}', space=sflag, size = 0x4, scoped, tag = 'scoped memory for tpu_custom_call.1']
    #allocation4 [shape = 's32[1]{0}', space=sflag, size = 0x4, scoped, tag = 'scoped memory for tpu_custom_call.1']
    #allocation5 [shape = 'u8[1024]{0}', space=vmem, size = 0x400, scoped, tag = 'output window, operand 0, single buffered']
    %6 = vsyncpa [#allocation3], 0
    %7 = vsyncpa [#allocation4], 0
    // Predicated region
    $region2: #{tpu_custom_call.1} parent=1 // pred_check
      _
    $region3: #{tpu_custom_call.1} parent=1 // pred_check_branch
      %9 = sbr.rel (0) target = $region5
    $region4: #{tpu_custom_call.1} parent=1 // pred_region
      %s11 = ssub.s32 32, 32
      %12 = vsyncadd [#allocation3], %s11
      %s14 = sshll.u32 [#allocation2], 4
      %s15 = int_to_ptr.vmem [resolvable:$true] %s14
      %17 = dma.hbm_to_vmem [thread:$0]  %s0, 32, %s15, [#allocation3]
    $region5: #{tpu_custom_call.1} parent=1 // pred_fallthru
      _
    // Predicated region
    $region6: #{tpu_custom_call.1} parent=1 // pred_check
      _
    $region7: #{tpu_custom_call.1} parent=1 // pred_check_branch
      %19 = sbr.rel (0) target = $region9
    $region8: #{tpu_custom_call.1} parent=1 // pred_region
      %20 = dma.done [#allocation3], 32
    $region9: #{tpu_custom_call.1} parent=1 // pred_fallthru
      _
    %v21 = vld [vmem:[#allocation2] sm:$0x3]
    %vm22 = vcmp.gt.f32.partialorder %v21, 20.0
    %v23 = vmul.f32 %v21, 1.442695
    %v24 = vpow.pop %v23
    %v25 = vadd.f32 %v24, 1.0
    %v26 = vlog2.pop %v25
    %v27 = vmul.f32 %v26, 0.6931472
    %v28 = vmul.f32 -0.5, %v24
    %v29 = vadd.f32 %v28, 1.0
    %v30 = vmul.f32 %v29, %v24
    %v31 = vand.u32 2147483647, %v24
    %vm32 = vcmp.lt.f32.partialorder %v31, 0.0004427343
    %v33 = vsel %vm32, %v30, %v27
    %v34 = vsel %vm22, %v21, %v33
    %v35 = vsub.f32 %v34, 0.6931472
    %v36 = vlaneseq
    %vm37 = vcmp.ge.s32.totalorder %v36, 0
    %vm38 = vcmp.lt.s32.totalorder %v36, 256
    %vm39 = vmand %vm37, %vm38
    %40 = vst.msk [vmem:[#allocation5] sm:$0x3] %vm39, %v35
    // Predicated region
    $region10: #{tpu_custom_call.1} parent=1 // pred_check
      _
    $region11: #{tpu_custom_call.1} parent=1 // pred_check_branch
      %42 = sbr.rel (0) target = $region13
    $region12: #{tpu_custom_call.1} parent=1 // pred_region
      %s44 = ssub.s32 32, 32
      %45 = vsyncadd [#allocation4], %s44
      %s47 = sshll.u32 [#allocation5], 4
      %s48 = int_to_ptr.vmem [resolvable:$true] %s47
      %50 = dma.vmem_to_hbm [thread:$0]  %s48, 32, %s1, [#allocation4]
    $region13: #{tpu_custom_call.1} parent=1 // pred_fallthru
      _
    // Predicated region
    $region14: #{tpu_custom_call.1} parent=1 // pred_check
      _
    $region15: #{tpu_custom_call.1} parent=1 // pred_check_branch
      %52 = sbr.rel (0) target = $region17
    $region16: #{tpu_custom_call.1} parent=1 // pred_region
      %53 = dma.done [#allocation4], 32
    $region17: #{tpu_custom_call.1} parent=1 // pred_fallthru
      _
    %54 = vsyncpa [#allocation3], 1
    %55 = vsyncpa [#allocation4], 1

</llo_original>
